<compile_context>
chip_gen: v6e
topology: v6e:2x2x1
jax: 0.10.0
libtpu: 0.0.40
codegen_flags: <defaults>
</compile_context>

<pallas_src>
import functools

import jax
import jax.numpy as jnp
from jax.experimental import pallas as pl
from jax.experimental.pallas import tpu as pltpu
from jax.scipy.linalg import block_diag


def _round_up(x, m):
    return (x + m - 1) // m * m


def _make_kernel(n_layers):
    def kernel(x_ref, *refs):
        # refs = (W0, b0, W1, b1, ..., W_{L-1}, b_{L-1}, out_ref)
        out_ref = refs[-1]
        wb = refs[:-1]
        h = x_ref[...].astype(jnp.float32)       # (tile_b, input_size)
        for l in range(n_layers):                # static unroll: L dots, L-1 ReLUs
            w = wb[2 * l][...]                   # packed weight (f32 or bf16 operand)
            b = wb[2 * l + 1][...]               # (1, fan_out) f32 -> sublane broadcast
            # Cast activations to the weight operand dtype (bf16 on v6e/v7x path),
            # accumulate in f32 on the MXU, keep bias-add / ReLU in f32 (v5e-safe).
            h = jnp.dot(h.astype(w.dtype), w,
                        preferred_element_type=jnp.float32) + b
            if l < n_layers - 1:
                h = jnp.maximum(h, 0.0)          # ReLU
                # TODO(synk): nn.Dropout is identity in eval mode; train-mode
                # dropout masking is intentionally not applied here.
        out_ref[...] = h.astype(out_ref.dtype)   # (tile_b, out_width) lane-dense store

    return kernel


def init_task_params(key, input_size, hidden_size, n_hidden, n_outputs):
    """PyTorch-style (uniform +/- 1/sqrt(fan_in)) per-task params.

    Returns [W0, b0, W1, b1, ...] with
      W_l : (n_outputs, in_l, out_l)   stacked over task nets
      b_l : (n_outputs, out_l)
    """
    dims = [input_size] + [hidden_size] * n_hidden + [1]
    params = []
    for l in range(len(dims) - 1):
        fan_in, fan_out = dims[l], dims[l + 1]
        key, kw, kb = jax.random.split(key, 3)
        bound = 1.0 / (fan_in ** 0.5)
        w = jax.random.uniform(kw, (n_outputs, fan_in, fan_out),
                               jnp.float32, -bound, bound)
        b = jax.random.uniform(kb, (n_outputs, fan_out),
                               jnp.float32, -bound, bound)
        params += [w, b]
    return params


def pack_params(per_task, weight_dtype=jnp.float32, lane_pad=128):
    """Pack per-task params into fused/block-diagonal form (done once, on host).

    Layer 0 (shared input):  W -> (input, T*out0),           b -> (1, T*out0)
    Layers 1..L-1:           W -> block_diag (T*in, T*out),  b -> (1, T*out)
    The last layer's (T*hidden, T) block matrix is zero-padded on the column
    axis to a multiple of 128 so the kernel's output store is lane-dense; the
    real task outputs occupy columns [0, T) and the wrapper slices them out.
    Weights are stored in `weight_dtype` (bf16 recommended on v6e/v7x); biases
    stay f32 so the bias-add/ReLU never needs bf16 VPU support (v5e).
    """
    n_layers = len(per_task) // 2
    w0, b0 = per_task[0], per_task[1]
    T, d_in, d_out = w0.shape
    hidden = per_task[2].shape[1] if n_layers > 1 else d_out

    # Block-diag packing only pays off while the packed width fits roughly one
    # MXU tile; beyond that (T-1)/T of the weight is zeros -> wasted MXU pushes
    # and O((T*h)^2) VMEM (critical on v7x's 64 MiB / v5e's 128-wide MXU).
    assert T * hidden <= 256, (
        "T*hidden > 256: block-diag packing wastes MXU/VMEM quadratically; "
        "use a task grid axis with stacked (T, h, h) weights instead")
    # TODO(synk): implement the task-grid (stacked-weights) path for large T*hidden.

    packed = []
    packed.append(jnp.transpose(w0, (1, 0, 2)).reshape(d_in, T * d_out)
                  .astype(weight_dtype))
    packed.append(b0.reshape(1, T * d_out).astype(jnp.float32))
    for l in range(1, n_layers):
        w, b = per_task[2 * l], per_task[2 * l + 1]
        w_p = block_diag(*[w[t] for t in range(w.shape[0])])
        b_p = b.reshape(1, -1)
        if l == n_layers - 1:
            # Lane-dense output head: zero columns appended AFTER the real outputs.
            out_width = max(lane_pad, _round_up(w_p.shape[1], lane_pad))
            w_p = jnp.pad(w_p, ((0, 0), (0, out_width - w_p.shape[1])))
            b_p = jnp.pad(b_p, ((0, 0), (0, out_width - b_p.shape[1])))
        packed.append(w_p.astype(weight_dtype))
        packed.append(b_p.astype(jnp.float32))
    return packed


@functools.partial(jax.jit, static_argnames=("n_outputs", "n_layers"))
def task_independent_layers(x, packed, *, n_outputs, n_layers):
    batch, input_size = x.shape
    out_width = int(packed[-1].shape[-1])        # lane-padded head width (>=128)

    # ---- Batch tiling: big tiles (kernel is per-grid-step-overhead-bound),
    # wrapper-side padding instead of a divisibility assert, and >=2 grid steps
    # for large batches so v7x's two TensorCores both get a "parallel" shard.
    cap = 1024
    padded_batch = _round_up(batch, 8)
    tile_b = min(padded_batch, cap)
    if padded_batch > 512 and padded_batch // tile_b < 2:
        tile_b = _round_up(pl.cdiv(padded_batch, 2), 8)
    padded_batch = _round_up(padded_batch, tile_b)
    if padded_batch != batch:
        x = jnp.pad(x, ((0, padded_batch - batch), (0, 0)))
    grid = (padded_batch // tile_b,)

    kernel = _make_kernel(n_layers)

    in_specs = [pl.BlockSpec((tile_b, input_size), lambda i: (i, 0))]
    for p in packed:
        # Grid-invariant weights/biases: single-buffer them (default double-
        # buffering would just double their VMEM residency for no overlap).
        in_specs.append(pl.BlockSpec(p.shape, lambda i: (0, 0),
                                     pipeline_mode=pl.Buffered(1)))
    out_specs = pl.BlockSpec((tile_b, out_width), lambda i: (i, 0))

    flops = 0
    for l in range(n_layers):
        w = packed[2 * l]
        flops += 2 * padded_batch * int(w.shape[0]) * int(w.shape[1])
    bytes_accessed = (int(x.size) * x.dtype.itemsize
                      + sum(int(p.size) * p.dtype.itemsize for p in packed)
                      + padded_batch * out_width * 4)

    # Explicit VMEM budget: single-buffered weights + double-buffered x/out
    # tiles + live activations, with 2x headroom, clamped to a sane range.
    weight_bytes = sum(int(p.size) * p.dtype.itemsize for p in packed)
    io_bytes = 2 * (tile_b * input_size + tile_b * out_width) * 4
    act_bytes = 4 * tile_b * max(int(p.shape[-1]) for p in packed) * 4
    vmem_limit = min(100 << 20,
                     max(16 << 20, 2 * (weight_bytes + io_bytes + act_bytes)))

    out = pl.pallas_call(
        kernel,
        out_shape=jax.ShapeDtypeStruct((padded_batch, out_width), jnp.float32),
        grid=grid,
        in_specs=in_specs,
        out_specs=out_specs,
        compiler_params=pltpu.CompilerParams(
            dimension_semantics=("parallel",),
            vmem_limit_bytes=int(vmem_limit)),
        cost_estimate=pl.CostEstimate(flops=int(flops), transcendentals=0,
                                      bytes_accessed=int(bytes_accessed)),
    )(x, *packed)
    return out[:batch, :n_outputs]


def _reference(x, per_task, n_outputs, n_layers):
    cols = []
    for t in range(n_outputs):
        h = x
        for l in range(n_layers):
            h = h @ per_task[2 * l][t] + per_task[2 * l + 1][t]
            if l < n_layers - 1:
                h = jnp.maximum(h, 0.0)
        cols.append(h)
    return jnp.concatenate(cols, axis=1)


if __name__ == "__main__":
    # Small shapes consistent with the module's forward.
    batch = 8
    input_size = 16
    hidden_size = 32
    n_hidden = 2
    n_outputs = 3
    n_layers = n_hidden + 1  # n_hidden hidden layers + final Linear(hidden, 1)

    key = jax.random.PRNGKey(0)
    kx, kp = jax.random.split(key)
    x = jax.random.normal(kx, (batch, input_size), jnp.float32)

    per_task = init_task_params(kp, input_size, hidden_size, n_hidden, n_outputs)
    ref = _reference(x, per_task, n_outputs, n_layers)

    # f32-operand path: matches the reference tightly.
    packed_f32 = pack_params(per_task, weight_dtype=jnp.float32)
    out = task_independent_layers(x, packed_f32,
                                  n_outputs=n_outputs, n_layers=n_layers)
    out = jax.block_until_ready(out)
    assert out.shape == (batch, n_outputs)
    assert jnp.allclose(out, ref, atol=1e-5, rtol=1e-5)

    # bf16 MXU-operand path (v6e/v7x recommendation): f32 accumulation,
    # bf16-mantissa-level tolerance.
    packed_bf16 = pack_params(per_task, weight_dtype=jnp.bfloat16)
    out_bf16 = jax.block_until_ready(
        task_independent_layers(x, packed_bf16,
                                n_outputs=n_outputs, n_layers=n_layers))
    assert out_bf16.shape == (batch, n_outputs)
    assert jnp.allclose(out_bf16, ref, atol=5e-2, rtol=5e-2)

    # Non-divisible batch exercises the wrapper-side padding (no assert now).
    x_odd = jax.random.normal(kx, (batch + 5, input_size), jnp.float32)
    out_odd = jax.block_until_ready(
        task_independent_layers(x_odd, packed_f32,
                                n_outputs=n_outputs, n_layers=n_layers))
    ref_odd = _reference(x_odd, per_task, n_outputs, n_layers)
    assert out_odd.shape == (batch + 5, n_outputs)
    assert jnp.allclose(out_odd, ref_odd, atol=1e-5, rtol=1e-5)

    print("KERNEL_OK")
</pallas_src>

<mosaic_0001>
module attributes {stable_mosaic.version = 11 : i64} {
  func.func @kernel(%arg0: i32, %arg1: memref<8x16xf32, #tpu.memory_space<vmem>>, %arg2: memref<16x96xf32, #tpu.memory_space<vmem>>, %arg3: memref<1x96xf32, #tpu.memory_space<vmem>>, %arg4: memref<96x96xf32, #tpu.memory_space<vmem>>, %arg5: memref<1x96xf32, #tpu.memory_space<vmem>>, %arg6: memref<96x128xf32, #tpu.memory_space<vmem>>, %arg7: memref<1x128xf32, #tpu.memory_space<vmem>>, %arg8: memref<8x128xf32, #tpu.memory_space<vmem>>) attributes {dimension_semantics = [#tpu.dimension_semantics<parallel>], iteration_bounds = array<i64: 1>, scalar_prefetch = 0 : i64, scratch_operands = 0 : i64, tpu.core_type = #tpu.core_type<tc>, window_params = [{transform_indices = @transform_0, window_bounds = array<i64: 8, 16>}, {pipeline_mode = #tpu.pipeline_mode<synchronous>, transform_indices = @transform_1, window_bounds = array<i64: 16, 96>}, {pipeline_mode = #tpu.pipeline_mode<synchronous>, transform_indices = @transform_2, window_bounds = array<i64: 1, 96>}, {pipeline_mode = #tpu.pipeline_mode<synchronous>, transform_indices = @transform_3, window_bounds = array<i64: 96, 96>}, {pipeline_mode = #tpu.pipeline_mode<synchronous>, transform_indices = @transform_4, window_bounds = array<i64: 1, 96>}, {pipeline_mode = #tpu.pipeline_mode<synchronous>, transform_indices = @transform_5, window_bounds = array<i64: 96, 128>}, {pipeline_mode = #tpu.pipeline_mode<synchronous>, transform_indices = @transform_6, window_bounds = array<i64: 1, 128>}, {transform_indices = @transform_7, window_bounds = array<i64: 8, 128>}]} {
    %c0 = arith.constant 0 : index
    %c0_0 = arith.constant 0 : index
    %0 = vector.load %arg1[%c0, %c0_0] : memref<8x16xf32, #tpu.memory_space<vmem>>, vector<8x16xf32>
    %c0_1 = arith.constant 0 : index
    %c0_2 = arith.constant 0 : index
    %1 = vector.load %arg2[%c0_1, %c0_2] : memref<16x96xf32, #tpu.memory_space<vmem>>, vector<16x96xf32>
    %c0_3 = arith.constant 0 : index
    %c0_4 = arith.constant 0 : index
    %2 = vector.load %arg3[%c0_3, %c0_4] : memref<1x96xf32, #tpu.memory_space<vmem>>, vector<1x96xf32>
    %cst = arith.constant dense<0.000000e+00> : vector<8x96xf32>
    %3 = tpu.matmul %0, %1, %cst {dimension_numbers = #tpu.dot_dimension_numbers<[1], [0], [0], [1], [0, 0, 1, 1], [], []>} : vector<8x16xf32>, vector<16x96xf32>, vector<8x96xf32> -> vector<8x96xf32>
    %4 = vector.broadcast %2 : vector<1x96xf32> to vector<8x96xf32>
    %5 = arith.addf %3, %4 : vector<8x96xf32>
    %cst_5 = arith.constant 0.000000e+00 : f32
    %6 = vector.broadcast %cst_5 : f32 to vector<8x96xf32>
    %7 = arith.maximumf %5, %6 : vector<8x96xf32>
    %c0_6 = arith.constant 0 : index
    %c0_7 = arith.constant 0 : index
    %8 = vector.load %arg4[%c0_6, %c0_7] : memref<96x96xf32, #tpu.memory_space<vmem>>, vector<96x96xf32>
    %c0_8 = arith.constant 0 : index
    %c0_9 = arith.constant 0 : index
    %9 = vector.load %arg5[%c0_8, %c0_9] : memref<1x96xf32, #tpu.memory_space<vmem>>, vector<1x96xf32>
    %cst_10 = arith.constant dense<0.000000e+00> : vector<8x96xf32>
    %10 = tpu.matmul %7, %8, %cst_10 {dimension_numbers = #tpu.dot_dimension_numbers<[1], [0], [0], [1], [0, 0, 1, 1], [], []>} : vector<8x96xf32>, vector<96x96xf32>, vector<8x96xf32> -> vector<8x96xf32>
    %11 = vector.broadcast %9 : vector<1x96xf32> to vector<8x96xf32>
    %12 = arith.addf %10, %11 : vector<8x96xf32>
    %cst_11 = arith.constant 0.000000e+00 : f32
    %13 = vector.broadcast %cst_11 : f32 to vector<8x96xf32>
    %14 = arith.maximumf %12, %13 : vector<8x96xf32>
    %c0_12 = arith.constant 0 : index
    %c0_13 = arith.constant 0 : index
    %15 = vector.load %arg6[%c0_12, %c0_13] : memref<96x128xf32, #tpu.memory_space<vmem>>, vector<96x128xf32>
    %c0_14 = arith.constant 0 : index
    %c0_15 = arith.constant 0 : index
    %16 = vector.load %arg7[%c0_14, %c0_15] : memref<1x128xf32, #tpu.memory_space<vmem>>, vector<1x128xf32>
    %cst_16 = arith.constant dense<0.000000e+00> : vector<8x128xf32>
    %17 = tpu.matmul %14, %15, %cst_16 {dimension_numbers = #tpu.dot_dimension_numbers<[1], [0], [0], [1], [0, 0, 1, 1], [], []>} : vector<8x96xf32>, vector<96x128xf32>, vector<8x128xf32> -> vector<8x128xf32>
    %18 = vector.broadcast %16 : vector<1x128xf32> to vector<8x128xf32>
    %19 = arith.addf %17, %18 : vector<8x128xf32>
    %c0_17 = arith.constant 0 : index
    %c0_18 = arith.constant 0 : index
    %20 = vector.load %arg8[%c0_17, %c0_18] : memref<8x128xf32, #tpu.memory_space<vmem>>, vector<8x128xf32>
    tpu.vector_store %arg8[%c0_17, %c0_18], %19 {strides = array<i32>} : memref<8x128xf32, #tpu.memory_space<vmem>>, vector<8x128xf32>,
    return
  }
  func.func @transform_0(%arg0: i32) -> (i32, i32) {
    %c0_i32 = arith.constant 0 : i32
    %c0_i32_0 = arith.constant 0 : i32
    return %arg0, %c0_i32 : i32, i32
  }
  func.func @transform_1(%arg0: i32) -> (i32, i32) {
    %c0_i32 = arith.constant 0 : i32
    %c0_i32_0 = arith.constant 0 : i32
    %c0_i32_1 = arith.constant 0 : i32
    return %c0_i32, %c0_i32_0 : i32, i32
  }
  func.func @transform_2(%arg0: i32) -> (i32, i32) {
    %c0_i32 = arith.constant 0 : i32
    %c0_i32_0 = arith.constant 0 : i32
    %c0_i32_1 = arith.constant 0 : i32
    return %c0_i32, %c0_i32_0 : i32, i32
  }
  func.func @transform_3(%arg0: i32) -> (i32, i32) {
    %c0_i32 = arith.constant 0 : i32
    %c0_i32_0 = arith.constant 0 : i32
    %c0_i32_1 = arith.constant 0 : i32
    return %c0_i32, %c0_i32_0 : i32, i32
  }
  func.func @transform_4(%arg0: i32) -> (i32, i32) {
    %c0_i32 = arith.constant 0 : i32
    %c0_i32_0 = arith.constant 0 : i32
    %c0_i32_1 = arith.constant 0 : i32
    return %c0_i32, %c0_i32_0 : i32, i32
  }
  func.func @transform_5(%arg0: i32) -> (i32, i32) {
    %c0_i32 = arith.constant 0 : i32
    %c0_i32_0 = arith.constant 0 : i32
    %c0_i32_1 = arith.constant 0 : i32
    return %c0_i32, %c0_i32_0 : i32, i32
  }
  func.func @transform_6(%arg0: i32) -> (i32, i32) {
    %c0_i32 = arith.constant 0 : i32
    %c0_i32_0 = arith.constant 0 : i32
    %c0_i32_1 = arith.constant 0 : i32
    return %c0_i32, %c0_i32_0 : i32, i32
  }
  func.func @transform_7(%arg0: i32) -> (i32, i32) {
    %c0_i32 = arith.constant 0 : i32
    %c0_i32_0 = arith.constant 0 : i32
    return %arg0, %c0_i32 : i32, i32
  }
}

</mosaic_0001>

<llo_original>
// kernel: task_independent_layers.1
$region0: #{task_independent_layers.1}
  #allocation0 [shape = 'u32[]', space=smem, size = 0x4, offset = 0x4, fixed_abs, tag = 'smem constant byte address 0x4 - core index']
  #allocation1 [shape = 'u32[144,128]{1,0:T(1,128)}', space=vmem, size = 0x12000, scoped, tag = 'internal scratch']
  %s0 = inlined_call_operand.hbm [shape: f32[8,16], index: 0, kind: input, shape index: {}]
  %s1 = inlined_call_operand.hbm [shape: f32[16,96], index: 1, kind: input, shape index: {}]
  %s2 = inlined_call_operand.vmem [shape: f32[1,96], index: 2, kind: input, shape index: {}]
  %s3 = inlined_call_operand.hbm [shape: f32[96,96], index: 3, kind: input, shape index: {}]
  %s4 = inlined_call_operand.vmem [shape: f32[1,96], index: 4, kind: input, shape index: {}]
  %s5 = inlined_call_operand.hbm [shape: f32[96,128], index: 5, kind: input, shape index: {}]
  %s6 = inlined_call_operand.vmem [shape: f32[1,128], index: 6, kind: input, shape index: {}]
  %s7 = inlined_call_operand.vmem [shape: f32[8,128], index: 7, kind: output, shape index: {}]
  %s8 = sld [smem:[#allocation0]]
  $region54: #{task_independent_layers.1} parent=0
    _
  %s10 = ssub.s32 1, %s8
  %s11 = scalar_select 0, %s10, %s8
  $region1: #{task_independent_layers.1} parent=0
    #allocation2 [shape = 'u8[4096]{0}', space=vmem, size = 0x1000, scoped, tag = 'input window, operand 0, single buffered']
    #allocation3 [shape = 's32[1]{0}', space=sflag, size = 0x4, scoped, tag = 'scoped memory for task_independent_layers.1']
    #allocation4 [shape = 'u8[8192]{0}', space=vmem, size = 0x2000, scoped, tag = 'input window, operand 1, single buffered']
    #allocation5 [shape = 's32[1]{0}', space=sflag, size = 0x4, scoped, tag = 'scoped memory for task_independent_layers.1']
    #allocation6 [shape = 'u8[49152]{0}', space=vmem, size = 0xc000, scoped, tag = 'input window, operand 3, single buffered']
    #allocation7 [shape = 'u8[49152]{0}', space=vmem, size = 0xc000, scoped, tag = 'input window, operand 5, single buffered']
    #allocation8 [shape = 's32[1]{0}', space=sflag, size = 0x4, scoped, tag = 'scoped memory for task_independent_layers.1']
    %12 = vsyncpa [#allocation3], 0
    %13 = vsyncpa [#allocation5], 0
    %14 = vsyncpa [#allocation8], 0
    // Predicated region
    $region2: #{task_independent_layers.1} parent=1 // pred_check
      _
    $region3: #{task_independent_layers.1} parent=1 // pred_check_branch
      %16 = sbr.rel (0) target = $region5
    $region4: #{task_independent_layers.1} parent=1 // pred_region
      %s18 = ssub.s32 128, 128
      %19 = vsyncadd [#allocation3], %s18
      %s21 = sshll.u32 [#allocation2], 4
      %s22 = int_to_ptr.vmem [resolvable:$true] %s21
      %24 = dma.hbm_to_vmem [thread:$0]  %s0, 128, %s22, [#allocation3]
    $region5: #{task_independent_layers.1} parent=1 // pred_fallthru
      _
    // Predicated region
    $region6: #{task_independent_layers.1} parent=1 // pred_check
      _
    $region7: #{task_independent_layers.1} parent=1 // pred_check_branch
      %26 = sbr.rel (0) target = $region9
    $region8: #{task_independent_layers.1} parent=1 // pred_region
      %s28 = ssub.s32 256, 256
      %29 = vsyncadd [#allocation5], %s28
      %s30 = sshll.u32 [#allocation4], 4
      %s31 = int_to_ptr.vmem [resolvable:$true] %s30
      %36 = dma.hbm_to_vmem [thread:$0]  %s1, 256, %s31, [#allocation5], 128, 128, 8
    $region9: #{task_independent_layers.1} parent=1 // pred_fallthru
      _
    // Predicated region
    $region10: #{task_independent_layers.1} parent=1 // pred_check
      _
    $region11: #{task_independent_layers.1} parent=1 // pred_check_branch
      %38 = sbr.rel (0) target = $region13
    $region12: #{task_independent_layers.1} parent=1 // pred_region
      _
    $region13: #{task_independent_layers.1} parent=1 // pred_fallthru
      _
    // Predicated region
    $region14: #{task_independent_layers.1} parent=1 // pred_check
      _
    $region15: #{task_independent_layers.1} parent=1 // pred_check_branch
      %40 = sbr.rel (0) target = $region17
    $region16: #{task_independent_layers.1} parent=1 // pred_region
      %s42 = ssub.s32 1536, 1536
      %43 = vsyncadd [#allocation5], %s42
      %s44 = sshll.u32 [#allocation6], 4
      %s45 = int_to_ptr.vmem [resolvable:$true] %s44
      %50 = dma.hbm_to_vmem [thread:$0]  %s3, 1536, %s45, [#allocation5], 128, 128, 8
    $region17: #{task_independent_layers.1} parent=1 // pred_fallthru
      _
    // Predicated region
    $region18: #{task_independent_layers.1} parent=1 // pred_check
      _
    $region19: #{task_independent_layers.1} parent=1 // pred_check_branch
      %52 = sbr.rel (0) target = $region21
    $region20: #{task_independent_layers.1} parent=1 // pred_region
      _
    $region21: #{task_independent_layers.1} parent=1 // pred_fallthru
      _
    // Predicated region
    $region22: #{task_independent_layers.1} parent=1 // pred_check
      _
    $region23: #{task_independent_layers.1} parent=1 // pred_check_branch
      %54 = sbr.rel (0) target = $region25
    $region24: #{task_independent_layers.1} parent=1 // pred_region
      %s56 = ssub.s32 1536, 1536
      %57 = vsyncadd [#allocation8], %s56
      %s58 = sshll.u32 [#allocation7], 4
      %s59 = int_to_ptr.vmem [resolvable:$true] %s58
      %64 = dma.hbm_to_vmem [thread:$0]  %s5, 1536, %s59, [#allocation8], 128, 128, 8
    $region25: #{task_independent_layers.1} parent=1 // pred_fallthru
      _
    // Predicated region
    $region26: #{task_independent_layers.1} parent=1 // pred_check
      _
    $region27: #{task_independent_layers.1} parent=1 // pred_check_branch
      %66 = sbr.rel (0) target = $region29
    $region28: #{task_independent_layers.1} parent=1 // pred_region
      _
    $region29: #{task_independent_layers.1} parent=1 // pred_fallthru
      _
    // Predicated region
    $region30: #{task_independent_layers.1} parent=1 // pred_check
      _
    $region31: #{task_independent_layers.1} parent=1 // pred_check_branch
      %68 = sbr.rel (0) target = $region33
    $region32: #{task_independent_layers.1} parent=1 // pred_region
      %69 = dma.done [#allocation3], 128
    $region33: #{task_independent_layers.1} parent=1 // pred_fallthru
      _
    // Predicated region
    $region34: #{task_independent_layers.1} parent=1 // pred_check
      _
    $region35: #{task_independent_layers.1} parent=1 // pred_check_branch
      %71 = sbr.rel (0) target = $region37
    $region36: #{task_independent_layers.1} parent=1 // pred_region
      %72 = dma.done [#allocation5], 256
    $region37: #{task_independent_layers.1} parent=1 // pred_fallthru
      _
    // Predicated region
    $region38: #{task_independent_layers.1} parent=1 // pred_check
      _
    $region39: #{task_independent_layers.1} parent=1 // pred_check_branch
      %74 = sbr.rel (0) target = $region41
    $region40: #{task_independent_layers.1} parent=1 // pred_region
      %75 = dma.done [#allocation5], 1536
    $region41: #{task_independent_layers.1} parent=1 // pred_fallthru
      _
    // Predicated region
    $region42: #{task_independent_layers.1} parent=1 // pred_check
      _
    $region43: #{task_independent_layers.1} parent=1 // pred_check_branch
      %77 = sbr.rel (0) target = $region45
    $region44: #{task_independent_layers.1} parent=1 // pred_region
      %78 = dma.done [#allocation8], 1536
    $region45: #{task_independent_layers.1} parent=1 // pred_fallthru
      _
    %v79 = vld [vmem:[#allocation2] sm:$0xff]
    %v80 = vld [vmem:[#allocation4] sm:$0xff]
    %v81 = vld [vmem:[#allocation4 + $0x8] sm:$0xff]
    %v82 = vld [vmem:[%s2] sm:$0x1]
    %v84 = vlaneseq
    %v85 = vshrl.u32 %v84, 7
    %v86 = vsub.s32 0, %v85
    %v87 = vrot.slane %v82, %v86
    %vm89 = vcmask 130048
    %v91 = vsel %vm89, %v79, 0
    %93 = vmatprep.subr.mxu0 0.0
    %94 = vmatpush1.msra.mxu0 0.0
    %95 = vmatprep.subr.mxu0 0.0
    %96 = vmatpush1.msra.mxu0 0.0
    %97 = vmatprep.subr.mxu0 0.0
    %98 = vmatpush1.msra.mxu0 0.0
    %99 = vmatprep.subr.mxu0 0.0
    %100 = vmatpush1.msra.mxu0 0.0
    %101 = vmatprep.subr.mxu0 0.0
    %102 = vmatpush1.msra.mxu0 0.0
    %103 = vmatprep.subr.mxu0 0.0
    %104 = vmatpush1.msra.mxu0 0.0
    %105 = vmatprep.subr.mxu0 0.0
    %106 = vmatpush1.msra.mxu0 0.0
    %107 = vmatprep.subr.mxu0 0.0
    %108 = vmatpush1.msra.mxu0 0.0
    %109 = vmatprep.subr.mxu0 0.0
    %110 = vmatpush1.msra.mxu0 0.0
    %111 = vmatprep.subr.mxu0 0.0
    %112 = vmatpush1.msra.mxu0 0.0
    %113 = vmatprep.subr.mxu0 0.0
    %114 = vmatpush1.msra.mxu0 0.0
    %115 = vmatprep.subr.mxu0 0.0
    %116 = vmatpush1.msra.mxu0 0.0
    %117 = vmatprep.subr.mxu0 0.0
    %118 = vmatpush1.msra.mxu0 0.0
    %119 = vmatprep.subr.mxu0 0.0
    %120 = vmatpush1.msra.mxu0 0.0
    %121 = vmatprep.subr.mxu0 0.0
    %122 = vmatpush1.msra.mxu0 %v81
    %123 = vmatprep.subr.mxu0 0.0
    %124 = vmatpush1.msra.mxu0 %v80
    %125 = vmatprep.subr.mxu0 0.0
    %126 = vmatpush2.msra.mxu0 0.0
    %127 = vmatprep.subr.mxu0 0.0
    %128 = vmatpush2.msra.mxu0 0.0
    %129 = vmatprep.subr.mxu0 0.0
    %130 = vmatpush2.msra.mxu0 0.0
    %131 = vmatprep.subr.mxu0 0.0
    %132 = vmatpush2.msra.mxu0 0.0
    %133 = vmatprep.subr.mxu0 0.0
    %134 = vmatpush2.msra.mxu0 0.0
    %135 = vmatprep.subr.mxu0 0.0
    %136 = vmatpush2.msra.mxu0 0.0
    %137 = vmatprep.subr.mxu0 0.0
    %138 = vmatpush2.msra.mxu0 0.0
    %139 = vmatprep.subr.mxu0 0.0
    %140 = vmatpush2.msra.mxu0 0.0
    %141 = vmatprep.subr.mxu0 0.0
    %142 = vmatpush2.msra.mxu0 0.0
    %143 = vmatprep.subr.mxu0 0.0
    %144 = vmatpush2.msra.mxu0 0.0
    %145 = vmatprep.subr.mxu0 0.0
    %146 = vmatpush2.msra.mxu0 0.0
    %147 = vmatprep.subr.mxu0 0.0
    %148 = vmatpush2.msra.mxu0 0.0
    %149 = vmatprep.subr.mxu0 0.0
    %150 = vmatpush2.msra.mxu0 0.0
    %151 = vmatprep.subr.mxu0 0.0
    %152 = vmatpush2.msra.mxu0 0.0
    %153 = vmatprep.subr.mxu0 0.0
    %154 = vmatpush2.msra.mxu0 0.0
    %155 = vmatprep.subr.mxu0 0.0
    %156 = vmatpush2.msra.mxu0 0.0
    %157 = vmatprep.mubr.f32.mxu0 0.0
    %158 = vmatmul.mubr.f32.gmra.mxu0 %v91
    %v159 = vpop.f32.mrf.mxu0
    %v160 = vadd.f32 %v87, %v159
    %v161 = vpop.f32.mrf.mxu0
    %162 = vdwg.mxu0
    %v163 = vmax.f32 %v160, 0.0
    %v164 = vld [vmem:[#allocation6] sm:$0xff]
    %v165 = vld [vmem:[#allocation6 + $0x8] sm:$0xff]
    %v166 = vld [vmem:[#allocation6 + $0x10] sm:$0xff]
    %v167 = vld [vmem:[#allocation6 + $0x18] sm:$0xff]
    %v168 = vld [vmem:[#allocation6 + $0x20] sm:$0xff]
    %v169 = vld [vmem:[#allocation6 + $0x28] sm:$0xff]
    %v170 = vld [vmem:[#allocation6 + $0x30] sm:$0xff]
    %v171 = vld [vmem:[#allocation6 + $0x38] sm:$0xff]
    %v172 = vld [vmem:[#allocation6 + $0x40] sm:$0xff]
    %v173 = vld [vmem:[#allocation6 + $0x48] sm:$0xff]
    %v174 = vld [vmem:[#allocation6 + $0x50] sm:$0xff]
    %v175 = vld [vmem:[#allocation6 + $0x58] sm:$0xff]
    %v176 = vld [vmem:[%s4] sm:$0x1]
    %v178 = vlaneseq
    %v179 = vshrl.u32 %v178, 7
    %v180 = vsub.s32 0, %v179
    %v181 = vrot.slane %v176, %v180
    %vm183 = vcmask 785408
    %v185 = vsel %vm183, %v163, 0
    %187 = vmatprep.subr.mxu0 0.0
    %188 = vmatpush1.msra.mxu0 0.0
    %189 = vmatprep.subr.mxu0 0.0
    %190 = vmatpush1.msra.mxu0 0.0
    %191 = vmatprep.subr.mxu0 0.0
    %192 = vmatpush1.msra.mxu0 0.0
    %193 = vmatprep.subr.mxu0 0.0
    %194 = vmatpush1.msra.mxu0 0.0
    %195 = vmatprep.subr.mxu0 0.0
    %196 = vmatpush1.msra.mxu0 %v175
    %197 = vmatprep.subr.mxu0 0.0
    %198 = vmatpush1.msra.mxu0 %v174
    %199 = vmatprep.subr.mxu0 0.0
    %200 = vmatpush1.msra.mxu0 %v173
    %201 = vmatprep.subr.mxu0 0.0
    %202 = vmatpush1.msra.mxu0 %v172
    %203 = vmatprep.subr.mxu0 0.0
    %204 = vmatpush1.msra.mxu0 %v171
    %205 = vmatprep.subr.mxu0 0.0
    %206 = vmatpush1.msra.mxu0 %v170
    %207 = vmatprep.subr.mxu0 0.0
    %208 = vmatpush1.msra.mxu0 %v169
    %209 = vmatprep.subr.mxu0 0.0
    %210 = vmatpush1.msra.mxu0 %v168
    %211 = vmatprep.subr.mxu0 0.0
    %212 = vmatpush1.msra.mxu0 %v167
    %213 = vmatprep.subr.mxu0 0.0
    %214 = vmatpush1.msra.mxu0 %v166
    %215 = vmatprep.subr.mxu0 0.0
    %216 = vmatpush1.msra.mxu0 %v165
    %217 = vmatprep.subr.mxu0 0.0
    %218 = vmatpush1.msra.mxu0 %v164
    %219 = vmatprep.subr.mxu0 0.0
    %220 = vmatpush2.msra.mxu0 0.0
    %221 = vmatprep.subr.mxu0 0.0
    %222 = vmatpush2.msra.mxu0 0.0
    %223 = vmatprep.subr.mxu0 0.0
    %224 = vmatpush2.msra.mxu0 0.0
    %225 = vmatprep.subr.mxu0 0.0
    %226 = vmatpush2.msra.mxu0 0.0
    %227 = vmatprep.subr.mxu0 0.0
    %228 = vmatpush2.msra.mxu0 0.0
    %229 = vmatprep.subr.mxu0 0.0
    %230 = vmatpush2.msra.mxu0 0.0
    %231 = vmatprep.subr.mxu0 0.0
    %232 = vmatpush2.msra.mxu0 0.0
    %233 = vmatprep.subr.mxu0 0.0
    %234 = vmatpush2.msra.mxu0 0.0
    %235 = vmatprep.subr.mxu0 0.0
    %236 = vmatpush2.msra.mxu0 0.0
    %237 = vmatprep.subr.mxu0 0.0
    %238 = vmatpush2.msra.mxu0 0.0
    %239 = vmatprep.subr.mxu0 0.0
    %240 = vmatpush2.msra.mxu0 0.0
    %241 = vmatprep.subr.mxu0 0.0
    %242 = vmatpush2.msra.mxu0 0.0
    %243 = vmatprep.subr.mxu0 0.0
    %244 = vmatpush2.msra.mxu0 0.0
    %245 = vmatprep.subr.mxu0 0.0
    %246 = vmatpush2.msra.mxu0 0.0
    %247 = vmatprep.subr.mxu0 0.0
    %248 = vmatpush2.msra.mxu0 0.0
    %249 = vmatprep.subr.mxu0 0.0
    %250 = vmatpush2.msra.mxu0 0.0
    %251 = vmatprep.mubr.f32.mxu0 0.0
    %252 = vmatmul.mubr.f32.gmra.mxu0 %v185
    %v253 = vpop.f32.mrf.mxu0
    %v254 = vadd.f32 %v181, %v253
    %v255 = vpop.f32.mrf.mxu0
    %256 = vdwg.mxu0
    %v257 = vmax.f32 %v254, 0.0
    %v258 = vld [vmem:[#allocation7] sm:$0xff]
    %v259 = vld [vmem:[#allocation7 + $0x8] sm:$0xff]
    %v260 = vld [vmem:[#allocation7 + $0x10] sm:$0xff]
    %v261 = vld [vmem:[#allocation7 + $0x18] sm:$0xff]
    %v262 = vld [vmem:[#allocation7 + $0x20] sm:$0xff]
    %v263 = vld [vmem:[#allocation7 + $0x28] sm:$0xff]
    %v264 = vld [vmem:[#allocation7 + $0x30] sm:$0xff]
    %v265 = vld [vmem:[#allocation7 + $0x38] sm:$0xff]
    %v266 = vld [vmem:[#allocation7 + $0x40] sm:$0xff]
    %v267 = vld [vmem:[#allocation7 + $0x48] sm:$0xff]
    %v268 = vld [vmem:[#allocation7 + $0x50] sm:$0xff]
    %v269 = vld [vmem:[#allocation7 + $0x58] sm:$0xff]
    %v270 = vld [vmem:[%s6] sm:$0x1]
    %v272 = vlaneseq
    %v273 = vshrl.u32 %v272, 7
    %v274 = vsub.s32 0, %v273
    %v275 = vrot.slane %v270, %v274
    %v278 = vsel %vm183, %v257, 0
    %280 = vmatprep.subr.mxu0 0.0
    %281 = vmatpush1.msra.mxu0 0.0
    %282 = vmatprep.subr.mxu0 0.0
    %283 = vmatpush1.msra.mxu0 0.0
    %284 = vmatprep.subr.mxu0 0.0
    %285 = vmatpush1.msra.mxu0 0.0
    %286 = vmatprep.subr.mxu0 0.0
    %287 = vmatpush1.msra.mxu0 0.0
    %288 = vmatprep.subr.mxu0 0.0
    %289 = vmatpush1.msra.mxu0 %v269
    %290 = vmatprep.subr.mxu0 0.0
    %291 = vmatpush1.msra.mxu0 %v268
    %292 = vmatprep.subr.mxu0 0.0
    %293 = vmatpush1.msra.mxu0 %v267
    %294 = vmatprep.subr.mxu0 0.0
    %295 = vmatpush1.msra.mxu0 %v266
    %296 = vmatprep.subr.mxu0 0.0
    %297 = vmatpush1.msra.mxu0 %v265
    %298 = vmatprep.subr.mxu0 0.0
    %299 = vmatpush1.msra.mxu0 %v264
    %300 = vmatprep.subr.mxu0 0.0
    %301 = vmatpush1.msra.mxu0 %v263
    %302 = vmatprep.subr.mxu0 0.0
    %303 = vmatpush1.msra.mxu0 %v262
    %304 = vmatprep.subr.mxu0 0.0
    %305 = vmatpush1.msra.mxu0 %v261
    %306 = vmatprep.subr.mxu0 0.0
    %307 = vmatpush1.msra.mxu0 %v260
    %308 = vmatprep.subr.mxu0 0.0
    %309 = vmatpush1.msra.mxu0 %v259
    %310 = vmatprep.subr.mxu0 0.0
    %311 = vmatpush1.msra.mxu0 %v258
    %312 = vmatprep.subr.mxu0 0.0
    %313 = vmatpush2.msra.mxu0 0.0
    %314 = vmatprep.subr.mxu0 0.0
    %315 = vmatpush2.msra.mxu0 0.0
    %316 = vmatprep.subr.mxu0 0.0
    %317 = vmatpush2.msra.mxu0 0.0
    %318 = vmatprep.subr.mxu0 0.0
    %319 = vmatpush2.msra.mxu0 0.0
    %320 = vmatprep.subr.mxu0 0.0
    %321 = vmatpush2.msra.mxu0 0.0
    %322 = vmatprep.subr.mxu0 0.0
    %323 = vmatpush2.msra.mxu0 0.0
    %324 = vmatprep.subr.mxu0 0.0
    %325 = vmatpush2.msra.mxu0 0.0
    %326 = vmatprep.subr.mxu0 0.0
    %327 = vmatpush2.msra.mxu0 0.0
    %328 = vmatprep.subr.mxu0 0.0
    %329 = vmatpush2.msra.mxu0 0.0
    %330 = vmatprep.subr.mxu0 0.0
    %331 = vmatpush2.msra.mxu0 0.0
    %332 = vmatprep.subr.mxu0 0.0
    %333 = vmatpush2.msra.mxu0 0.0
    %334 = vmatprep.subr.mxu0 0.0
    %335 = vmatpush2.msra.mxu0 0.0
    %336 = vmatprep.subr.mxu0 0.0
    %337 = vmatpush2.msra.mxu0 0.0
    %338 = vmatprep.subr.mxu0 0.0
    %339 = vmatpush2.msra.mxu0 0.0
    %340 = vmatprep.subr.mxu0 0.0
    %341 = vmatpush2.msra.mxu0 0.0
    %342 = vmatprep.subr.mxu0 0.0
    %343 = vmatpush2.msra.mxu0 0.0
    %344 = vmatprep.mubr.f32.mxu0 0.0
    %345 = vmatmul.mubr.f32.gmra.mxu0 %v278
    %v346 = vpop.f32.mrf.mxu0
    %v347 = vadd.f32 %v275, %v346
    %v348 = vpop.f32.mrf.mxu0
    %349 = vdwg.mxu0
    %350 = vst [vmem:[%s7] sm:$0xff] %v347
    // Predicated region
    $region46: #{task_independent_layers.1} parent=1 // pred_check
      _
    $region47: #{task_independent_layers.1} parent=1 // pred_check_branch
      %352 = sbr.rel (0) target = $region49
    $region48: #{task_independent_layers.1} parent=1 // pred_region
      _
    $region49: #{task_independent_layers.1} parent=1 // pred_fallthru
      _
    // Predicated region
    $region50: #{task_independent_layers.1} parent=1 // pred_check
      _
    $region51: #{task_independent_layers.1} parent=1 // pred_check_branch
      %354 = sbr.rel (0) target = $region53
    $region52: #{task_independent_layers.1} parent=1 // pred_region
      _
    $region53: #{task_independent_layers.1} parent=1 // pred_fallthru
      _
    %355 = vsyncpa [#allocation3], 1
    %356 = vsyncpa [#allocation5], 1
    %357 = vsyncpa [#allocation8], 1

</llo_original>
